<compile_context>
chip_gen: v7x
topology: tpu7x:2x2x1
jax: 0.10.0
libtpu: 0.0.40
codegen_flags: <defaults>
</compile_context>

<pallas_src>
import jax
import jax.numpy as jnp
from jax.experimental import pallas as pl
from jax.experimental.pallas import tpu as pltpu

_MIB = 1024 * 1024


def _equivariant_kernel(x_ref, w_ref, o_ref):
    # x_ref: (TB, N, C_in)   w_ref: (2*C_in, C_out)   o_ref: (TB, N, C_out)
    tb, n, c_in = x_ref.shape
    c_out = o_ref.shape[-1]

    x = x_ref[...]                                            # (TB, N, C_in)
    xm = jnp.max(x, axis=1, keepdims=True)                    # (TB, 1, C_in)
    # concat([x, xm broadcast over N], -1) @ [Wl^T ; -Wg^T] == x@Wl^T - xm@Wg^T
    xcat = jnp.concatenate(
        [x, jnp.broadcast_to(xm, x.shape)], axis=-1)          # (TB, N, 2*C_in)
    w = w_ref[...]                                            # (2*C_in, C_out)

    if n % 8 == 0:
        # Sublane-aligned: collapse (TB, N) into one big row dim -> one MXU pass.
        out = jnp.dot(xcat.reshape(tb * n, 2 * c_in), w,
                      preferred_element_type=jnp.float32)
        out = out.reshape(tb, n, c_out)
    else:
        # Non-aligned N: a reshape would force a sublane relayout copy; use a
        # batched matmul instead (rhs broadcast over the small TB axis).
        wb = jnp.broadcast_to(w, (tb,) + w.shape)             # (TB, 2*C_in, C_out)
        out = jnp.einsum('bnc,bcd->bnd', xcat, wb,
                         preferred_element_type=jnp.float32)

    o_ref[...] = out.astype(o_ref.dtype)


def prepare_equivariant_weights(w_lambda, w_gamma, dtype=None):
    """Run ONCE at parameter setup (not per forward call).

    Converts PyTorch nn.Linear weights (C_out, C_in) into a single fused,
    pre-transposed matrix W_cat = [Wl^T ; -Wg^T] of shape (2*C_in, C_out) so
    the kernel computes Lambda(x) - Gamma(max(x)) in one matmul.
    Pass dtype=jnp.bfloat16 (and cast x to bf16) for the faster bf16 path.
    """
    w_cat = jnp.concatenate([w_lambda.T, -w_gamma.T], axis=0)
    if dtype is not None:
        w_cat = w_cat.astype(dtype)
    return w_cat


def _vmem_capacity_bytes():
    try:
        return int(pltpu.get_tpu_info().vmem_capacity_bytes)
    except Exception:
        return 64 * _MIB  # conservative fallback: v7x has the smallest per-core VMEM


def _step_vmem_bytes(tb, n, c_in, c_out, x_itemsize, out_itemsize):
    # Double-buffered x and out blocks plus the f32 compute intermediates
    # (broadcast xm, concat(x, xm) and the pre-cast f32 result).
    x_b = 2 * tb * n * c_in * x_itemsize
    o_b = 2 * tb * n * c_out * out_itemsize
    tmp = tb * n * (3 * c_in + c_out) * 4
    return x_b + o_b + tmp


def _choose_tb(B, n, c_in, c_out, x_itemsize, out_itemsize, w_itemsize,
               vmem_capacity):
    # Resident fused weight (Pallas double-buffers it by default; it is tiny).
    # TODO(synk): mark the weight BlockSpec pl.Buffered(1) once pinned to a jax
    # version where BlockSpec(pipeline_mode=...) is universally available.
    w_b = 2 * (2 * c_in) * c_out * w_itemsize
    budget = min(int(vmem_capacity * 0.6), 96 * _MIB) - w_b

    # Bytes-per-step target: >= ~4 MiB of x+out traffic to amortize the
    # ~0.35 us per-grid-step overhead on all generations (incl. v7x 3.2 TB/s).
    per_elem = n * (c_in * x_itemsize + c_out * out_itemsize)
    tb = min(B, max(1, pl.cdiv(4 * _MIB, per_elem)))
    # Keep >= 2 grid steps so the 'parallel' axis can shard over v7x's 2 TCs.
    if B >= 2:
        tb = min(tb, pl.cdiv(B, 2))
    while tb > 1 and _step_vmem_bytes(tb, n, c_in, c_out,
                                      x_itemsize, out_itemsize) > budget:
        tb = max(1, tb // 2)
    return tb
    # TODO(synk): for very large N (a (1, N, C_in) block that still exceeds
    # VMEM) add an N grid axis marked 'arbitrary' with a running max.


def equivariant_layer(x, w_cat, tb=None):
    """x: (B, N, C_in); w_cat: (2*C_in, C_out) from prepare_equivariant_weights.

    Returns Lambda(x) - Gamma(max(x, axis=1, keepdims=True)), shape (B, N, C_out).
    """
    B, N, C_in = x.shape
    K, C_out = w_cat.shape
    assert K == 2 * C_in, "w_cat must be (2*C_in, C_out); use prepare_equivariant_weights"

    x_is = jnp.dtype(x.dtype).itemsize
    o_is = x_is
    w_is = jnp.dtype(w_cat.dtype).itemsize
    vmem_capacity = _vmem_capacity_bytes()
    if tb is None:
        tb = _choose_tb(B, N, C_in, C_out, x_is, o_is, w_is, vmem_capacity)
    tb = max(1, min(tb, B))
    grid = (pl.cdiv(B, tb),)

    vmem_limit = int(min(
        vmem_capacity,
        max(32 * _MIB,
            _step_vmem_bytes(tb, N, C_in, C_out, x_is, o_is)
            + 2 * K * C_out * w_is + 8 * _MIB)))

    return pl.pallas_call(
        _equivariant_kernel,
        out_shape=jax.ShapeDtypeStruct((B, N, C_out), x.dtype),
        grid=grid,
        in_specs=[
            # TB batch elements per grid step (contiguous (TB, N, C_in) DMA).
            pl.BlockSpec((tb, N, C_in), lambda b: (b, 0, 0)),
            # Fused weight, resident across the grid (constant index map).
            pl.BlockSpec((K, C_out), lambda b: (0, 0)),
        ],
        # Exact (unpadded) output shape: masked tail-lane stores beat the extra
        # HBM bytes of a pad-then-slice path in this mem-bound kernel.
        out_specs=pl.BlockSpec((tb, N, C_out), lambda b: (b, 0, 0)),
        compiler_params=pltpu.CompilerParams(
            dimension_semantics=("parallel",),
            vmem_limit_bytes=vmem_limit),
    )(x, w_cat)


def _reference(x, w_lambda, w_gamma):
    xm = jnp.max(x, axis=1, keepdims=True)
    return x @ w_lambda.T - xm @ w_gamma.T


if __name__ == "__main__":
    key = jax.random.PRNGKey(0)

    # --- Test 1: module's toy sizes --------------------------------------
    B, N, C_in, C_out = 2, 8, 32, 32
    k_x, k_l, k_g = jax.random.split(key, 3)
    x = jax.random.normal(k_x, (B, N, C_in), dtype=jnp.float32)
    bound = 1.0 / jnp.sqrt(jnp.float32(C_in))
    w_lambda = jax.random.uniform(k_l, (C_out, C_in), jnp.float32, -bound, bound)
    w_gamma = jax.random.uniform(k_g, (C_out, C_in), jnp.float32, -bound, bound)

    w_cat = prepare_equivariant_weights(w_lambda, w_gamma)
    y = jax.block_until_ready(equivariant_layer(x, w_cat))
    y_ref = _reference(x, w_lambda, w_gamma)
    assert y.shape == (B, N, C_out)
    assert jnp.allclose(y, y_ref, atol=1e-5, rtol=1e-5), "mismatch vs reference (test 1)"

    # --- Test 2: multi-batch blocking + ragged last block -----------------
    B2, N2, C_in2, C_out2 = 10, 8, 64, 96
    k_x2, k_l2, k_g2 = jax.random.split(jax.random.PRNGKey(1), 3)
    x2 = jax.random.normal(k_x2, (B2, N2, C_in2), dtype=jnp.float32)
    b2 = 1.0 / jnp.sqrt(jnp.float32(C_in2))
    wl2 = jax.random.uniform(k_l2, (C_out2, C_in2), jnp.float32, -b2, b2)
    wg2 = jax.random.uniform(k_g2, (C_out2, C_in2), jnp.float32, -b2, b2)

    w_cat2 = prepare_equivariant_weights(wl2, wg2)
    y2 = jax.block_until_ready(equivariant_layer(x2, w_cat2, tb=4))  # grid=(3,), ragged tail
    y2_ref = _reference(x2, wl2, wg2)
    assert y2.shape == (B2, N2, C_out2)
    assert jnp.allclose(y2, y2_ref, atol=1e-4, rtol=1e-4), "mismatch vs reference (test 2)"

    # --- Test 3: N not a multiple of 8 -> batched-matmul fallback path ----
    B3, N3, C_in3, C_out3 = 3, 5, 16, 24
    k_x3, k_l3, k_g3 = jax.random.split(jax.random.PRNGKey(2), 3)
    x3 = jax.random.normal(k_x3, (B3, N3, C_in3), dtype=jnp.float32)
    b3 = 1.0 / jnp.sqrt(jnp.float32(C_in3))
    wl3 = jax.random.uniform(k_l3, (C_out3, C_in3), jnp.float32, -b3, b3)
    wg3 = jax.random.uniform(k_g3, (C_out3, C_in3), jnp.float32, -b3, b3)

    w_cat3 = prepare_equivariant_weights(wl3, wg3)
    y3 = jax.block_until_ready(equivariant_layer(x3, w_cat3))
    y3_ref = _reference(x3, wl3, wg3)
    assert y3.shape == (B3, N3, C_out3)
    assert jnp.allclose(y3, y3_ref, atol=1e-5, rtol=1e-5), "mismatch vs reference (test 3)"

    print("KERNEL_OK")
</pallas_src>

<mosaic_0001>
module attributes {stable_mosaic.version = 11 : i64} {
  func.func @_equivariant_kernel(%arg0: i32, %arg1: memref<1x8x32xf32, #tpu.memory_space<vmem>>, %arg2: memref<64x32xf32, #tpu.memory_space<vmem>>, %arg3: memref<1x8x32xf32, #tpu.memory_space<vmem>>) attributes {dimension_semantics = [#tpu.dimension_semantics<parallel>], iteration_bounds = array<i64: 2>, scalar_prefetch = 0 : i64, scratch_operands = 0 : i64, tpu.core_type = #tpu.core_type<tc>, window_params = [{transform_indices = @transform_0, window_bounds = array<i64: 1, 8, 32>}, {pipeline_mode = #tpu.pipeline_mode<synchronous>, transform_indices = @transform_1, window_bounds = array<i64: 64, 32>}, {transform_indices = @transform_2, window_bounds = array<i64: 1, 8, 32>}]} {
    %c0 = arith.constant 0 : index
    %c0_0 = arith.constant 0 : index
    %c0_1 = arith.constant 0 : index
    %0 = vector.load %arg1[%c0, %c0_0, %c0_1] : memref<1x8x32xf32, #tpu.memory_space<vmem>>, vector<1x8x32xf32>
    %cst = arith.constant dense<0xFF800000> : vector<1x32xf32>
    %1 = vector.multi_reduction <maximumf>, %0, %cst [1] : vector<1x8x32xf32> to vector<1x32xf32>
    %2 = vector.shape_cast %1 : vector<1x32xf32> to vector<1x1x32xf32>
    %3 = vector.shape_cast %2 : vector<1x1x32xf32> to vector<1x1x32xf32>
    %4 = vector.broadcast %3 : vector<1x1x32xf32> to vector<1x8x32xf32>
    %5 = tpu.concatenate %0, %4 in 2 : vector<1x8x32xf32>, vector<1x8x32xf32> -> vector<1x8x64xf32>
    %c0_2 = arith.constant 0 : index
    %c0_3 = arith.constant 0 : index
    %6 = vector.load %arg2[%c0_2, %c0_3] : memref<64x32xf32, #tpu.memory_space<vmem>>, vector<64x32xf32>
    %7 = vector.shape_cast %5 : vector<1x8x64xf32> to vector<8x64xf32>
    %cst_4 = arith.constant dense<0.000000e+00> : vector<8x32xf32>
    %8 = tpu.matmul %7, %6, %cst_4 {dimension_numbers = #tpu.dot_dimension_numbers<[1], [0], [0], [1], [0, 0, 1, 1], [], []>} : vector<8x64xf32>, vector<64x32xf32>, vector<8x32xf32> -> vector<8x32xf32>
    %9 = vector.shape_cast %8 : vector<8x32xf32> to vector<1x8x32xf32>
    %c0_5 = arith.constant 0 : index
    %c0_6 = arith.constant 0 : index
    %c0_7 = arith.constant 0 : index
    %10 = vector.load %arg3[%c0_5, %c0_6, %c0_7] : memref<1x8x32xf32, #tpu.memory_space<vmem>>, vector<1x8x32xf32>
    tpu.vector_store %arg3[%c0_5, %c0_6, %c0_7], %9 {strides = array<i32>} : memref<1x8x32xf32, #tpu.memory_space<vmem>>, vector<1x8x32xf32>,
    return
  }
  func.func @transform_0(%arg0: i32) -> (i32, i32, i32) {
    %c0_i32 = arith.constant 0 : i32
    %c0_i32_0 = arith.constant 0 : i32
    %c0_i32_1 = arith.constant 0 : i32
    return %arg0, %c0_i32, %c0_i32_0 : i32, i32, i32
  }
  func.func @transform_1(%arg0: i32) -> (i32, i32) {
    %c0_i32 = arith.constant 0 : i32
    %c0_i32_0 = arith.constant 0 : i32
    %c0_i32_1 = arith.constant 0 : i32
    return %c0_i32, %c0_i32_0 : i32, i32
  }
  func.func @transform_2(%arg0: i32) -> (i32, i32, i32) {
    %c0_i32 = arith.constant 0 : i32
    %c0_i32_0 = arith.constant 0 : i32
    %c0_i32_1 = arith.constant 0 : i32
    return %arg0, %c0_i32, %c0_i32_0 : i32, i32, i32
  }
}

</mosaic_0001>

<llo_original>
// kernel: tpu_custom_call.1
$region0: #{tpu_custom_call.1}
  #allocation0 [shape = 'u32[]', space=smem, size = 0x4, offset = 0x4, fixed_abs, tag = 'smem constant byte address 0x4 - core index']
  #allocation1 [shape = 'u32[144,128]{1,0:T(1,128)}', space=vmem, size = 0x12000, scoped, tag = 'internal scratch']
  %s0 = inlined_call_operand.vmem [shape: f32[2,8,32], index: 0, kind: input, shape index: {}]
  %s1 = inlined_call_operand.vmem [shape: f32[64,32], index: 1, kind: input, shape index: {}]
  %s2 = inlined_call_operand.hbm [shape: f32[2,8,32], index: 2, kind: output, shape index: {}]
  %s3 = sld [smem:[#allocation0]]
  $region41: #{tpu_custom_call.1} parent=0
    _
  %s5 = ssub.s32 1, %s3
  %s6 = scalar_select 0, %s5, %s3
  $region1: #{tpu_custom_call.1} parent=0
    #allocation2 [shape = 'u8[8192]{0}', space=vmem, size = 0x2000, scoped, tag = 'output window, operand 0']
    #allocation3 [shape = 's32[2]{0}', space=sflag, size = 0x8, scoped, tag = 'scoped memory for tpu_custom_call.1']
    %7 = vsyncpa [#allocation3], 0
    %s8 = scalar_lea.sflag [#allocation3], 1
    %9 = vsyncpa %s8, 0
    loop: start=0, step=1, limit=4
    $region2: #{tpu_custom_call.1} parent=1 // loop_pre_header
      _
    $region3: #{tpu_custom_call.1} parent=1 // loop_header
      %s11 = sphi 0, %s15
      %p12 = scmp.ge.s32.totalorder %s11, 4
      %s21 = sphi 0, %s23
      %s24 = sphi 0, %s21
      %s25 = sphi 0, %s24
      %s41 = sphi 0, %s25
      %s45 = sphi 0, %s45
      %s47 = sphi 0, %s45
      %s48 = sphi 0, %s47
      %s62 = sphi 0, %s48
      %s68 = sphi 0, %s70
      %s71 = sphi 0, %s68
      %s72 = sphi 0, %s71
      %s88 = sphi 0, %s72
    $region4: #{tpu_custom_call.1} parent=1 // loop_header_branch
      %14 = sbr.rel (%p12) target = $region8
    $region5: #{tpu_custom_call.1} parent=1 // loop_body
      %s16 = ssub.s32 %s11, 1
      %s17 = ssub.s32 %s11, 2
      %s18 = sadd.s32 %s11, 1
      %s19 = ssub.s32 %s11, %s18
      %p20 = scmp.eq.s32.totalorder %s19, 0
      %s22 = sadd.s32 %s21, 1
      %s23 = scalar_select %p20, %s21, %s22
      %p26 = pneg %p20
      %p27 = scmp.eq.s32.totalorder %s11, 1
      %p28 = por %p26, %p27
      %p29 = scmp.ne.s32.totalorder %s21, %s24
      %p30 = scmp.eq.s32.totalorder %s11, 0
      %p31 = por %p29, %p30
      %p32 = scmp.ne.s32.totalorder %s21, %s24
      %p33 = scmp.eq.s32.totalorder %s16, 1
      %p34 = por %p32, %p33
      %p35 = scmp.ne.s32.totalorder %s24, %s25
      %p36 = scmp.eq.s32.totalorder %s16, 0
      %p37 = por %p35, %p36
      %p38 = scmp.ne.s32.totalorder %s24, %s25
      %p39 = scmp.eq.s32.totalorder %s17, 1
      %p40 = por %p38, %p39
      %p42 = scmp.ne.s32.totalorder %s25, %s41
      %p43 = scmp.eq.s32.totalorder %s17, 0
      %p44 = por %p42, %p43
      %s46 = sadd.s32 %s45, 1
      %p49 = scmp.eq.s32.totalorder %s11, 1
      %p50 = scmp.ne.s32.totalorder %s45, %s47
      %p51 = scmp.eq.s32.totalorder %s11, 0
      %p52 = por %p50, %p51
      %p53 = scmp.ne.s32.totalorder %s45, %s47
      %p54 = scmp.eq.s32.totalorder %s16, 1
      %p55 = por %p53, %p54
      %p56 = scmp.ne.s32.totalorder %s47, %s48
      %p57 = scmp.eq.s32.totalorder %s16, 0
      %p58 = por %p56, %p57
      %p59 = scmp.ne.s32.totalorder %s47, %s48
      %p60 = scmp.eq.s32.totalorder %s17, 1
      %p61 = por %p59, %p60
      %p63 = scmp.ne.s32.totalorder %s48, %s62
      %p64 = scmp.eq.s32.totalorder %s17, 0
      %p65 = por %p63, %p64
      %s66 = ssub.s32 %s11, %s18
      %p67 = scmp.eq.s32.totalorder %s66, 0
      %s69 = sadd.s32 %s68, 1
      %s70 = scalar_select %p67, %s68, %s69
      %p73 = pneg %p67
      %p74 = scmp.eq.s32.totalorder %s11, 1
      %p75 = por %p73, %p74
      %p76 = scmp.ne.s32.totalorder %s68, %s71
      %p77 = scmp.eq.s32.totalorder %s11, 0
      %p78 = por %p76, %p77
      %p79 = scmp.ne.s32.totalorder %s68, %s71
      %p80 = scmp.eq.s32.totalorder %s16, 1
      %p81 = por %p79, %p80
      %p82 = scmp.ne.s32.totalorder %s71, %s72
      %p83 = scmp.eq.s32.totalorder %s16, 0
      %p84 = por %p82, %p83
      %p85 = scmp.ne.s32.totalorder %s71, %s72
      %p86 = scmp.eq.s32.totalorder %s17, 1
      %p87 = por %p85, %p86
      %p89 = scmp.ne.s32.totalorder %s72, %s88
      %p90 = scmp.eq.s32.totalorder %s17, 0
      %p91 = por %p89, %p90
      %p92 = scmp.le.s32.totalorder 1, %s11
      %p93 = scmp.lt.s32.totalorder %s11, 3
      %p94 = pnand %p92, %p93
      %p95 = pneg %p94
      // Predicated region
      $region9: #{tpu_custom_call.1} parent=5 // pred_check
        _
      $region10: #{tpu_custom_call.1} parent=5 // pred_check_branch
        %97 = sbr.rel (%p94) target = $region12
      $region11: #{tpu_custom_call.1} parent=5 // pred_region
        %s98 = ssub.s32 %s11, 1
        // Predicated region
        $region13: #{tpu_custom_call.1} parent=11 // pred_check
          %p99 = pneg %p58
        $region14: #{tpu_custom_call.1} parent=11 // pred_check_branch
          %101 = sbr.rel (%p99) target = $region16
        $region15: #{tpu_custom_call.1} parent=11 // pred_region
          _
        $region16: #{tpu_custom_call.1} parent=11 // pred_fallthru
          _
      $region12: #{tpu_custom_call.1} parent=5 // pred_fallthru
        _
      %p102 = scmp.lt.s32.totalorder %s11, 2
      // Predicated region
      $region17: #{tpu_custom_call.1} parent=5 // pred_check
        %p103 = pneg %p102
      $region18: #{tpu_custom_call.1} parent=5 // pred_check_branch
        %105 = sbr.rel (%p103) target = $region20
      $region19: #{tpu_custom_call.1} parent=5 // pred_region
        // Predicated region
        $region21: #{tpu_custom_call.1} parent=19 // pred_check
          %p106 = pneg %p31
        $region22: #{tpu_custom_call.1} parent=19 // pred_check_branch
          %108 = sbr.rel (%p106) target = $region24
        $region23: #{tpu_custom_call.1} parent=19 // pred_region
          %p109 = scmp.lt.s32.totalorder %s11, 1
          %s110 = scalar_select %p109, %s11, 1
          %s111 = smul.addr %s110, 8
          %s112 = scalar_lea.vmem %s0, %s111
        $region24: #{tpu_custom_call.1} parent=19 // pred_fallthru
          _
      $region20: #{tpu_custom_call.1} parent=5 // pred_fallthru
        _
      %p113 = scmp.le.s32.totalorder 1, %s11
      %p114 = scmp.lt.s32.totalorder %s11, 3
      %p115 = pnand %p113, %p114
      %p116 = pneg %p115
      // Predicated region
      $region25: #{tpu_custom_call.1} parent=5 // pred_check
        _
      $region26: #{tpu_custom_call.1} parent=5 // pred_check_branch
        %118 = sbr.rel (%p115) target = $region28
      $region27: #{tpu_custom_call.1} parent=5 // pred_region
        %s119 = ssub.s32 %s11, 1
        %p120 = scmp.lt.s32.totalorder %s16, 1
        %s121 = scalar_select %p120, %s16, 1
        %s122 = smul.addr %s121, 8
        %s123 = scalar_lea.vmem %s0, %s122
        %p124 = pneg %p37
        %p125 = pneg %p34
        %p126 = pneg %p58
        %p127 = pneg %p55
        %p128 = pneg %p84
        %p129 = pneg %p81
        %s130 = sand.u32 %s71, 1
        %s131 = scalar_lea.sflag [#allocation3], %s130
        %s132 = sand.u32 %s71, 1
        %s133 = smul.addr %s132, 8
        %s134 = scalar_lea.vmem [#allocation2], %s133
        %p135 = scmp.lt.s32.totalorder %s16, 1
        %s136 = scalar_select %p135, %s16, 1
        %s137 = smul.addr %s136, 8
        %s138 = scalar_lea.vmem %s0, %s137
        %v139 = vld [vmem:[%s138] sm:$0xff]
        %vm140 = vcmask 261120
        %v141 = vsel %vm140, %v139, -inf
        %v142 = vrot.slane %v141, 4
        %v143 = vmax.f32 %v141, %v142
        %v144 = vrot.slane %v143, 2
        %v145 = vmax.f32 %v143, %v144
        %v146 = vrot.slane %v145, 1
        %v147 = vmax.f32 %v145, %v146
        %149 = vrot.lane.b32.xlu0 %v147, 32
        %v150 = vpop.permute.xlu0 %149
        %v152 = vsel %vm140, %v139, %v150
        %v153 = vld [vmem:[%s1] sm:$0xff]
        %v154 = vld [vmem:[%s1 + $0x8] sm:$0xff]
        %v155 = vld [vmem:[%s1 + $0x10] sm:$0xff]
        %v156 = vld [vmem:[%s1 + $0x18] sm:$0xff]
        %v157 = vld [vmem:[%s1 + $0x20] sm:$0xff]
        %v158 = vld [vmem:[%s1 + $0x28] sm:$0xff]
        %v159 = vld [vmem:[%s1 + $0x30] sm:$0xff]
        %v160 = vld [vmem:[%s1 + $0x38] sm:$0xff]
        %vm161 = vcmask 523264
        %v163 = vsel %vm161, %v152, 0
        %165 = vmatprep.subr.mxu0 0.0
        %166 = vmatpush1.msra.mxu0 %v153
        %167 = vmatprep.subr.mxu0 0.0
        %168 = vmatpush1.msra.mxu0 %v154
        %169 = vmatprep.subr.mxu0 0.0
        %170 = vmatpush1.msra.mxu0 %v155
        %171 = vmatprep.subr.mxu0 0.0
        %172 = vmatpush1.msra.mxu0 %v156
        %173 = vmatprep.subr.mxu0 0.0
        %174 = vmatpush1.msra.mxu0 %v157
        %175 = vmatprep.subr.mxu0 0.0
        %176 = vmatpush1.msra.mxu0 %v158
        %177 = vmatprep.subr.mxu0 0.0
        %178 = vmatpush1.msra.mxu0 %v159
        %179 = vmatprep.subr.mxu0 0.0
        %180 = vmatpush1.msra.mxu0 %v160
        %181 = vmatprep.subr.mxu0 0.0
        %182 = vmatpush1.msra.mxu0 0.0
        %183 = vmatprep.subr.mxu0 0.0
        %184 = vmatpush1.msra.mxu0 0.0
        %185 = vmatprep.subr.mxu0 0.0
        %186 = vmatpush1.msra.mxu0 0.0
        %187 = vmatprep.subr.mxu0 0.0
        %188 = vmatpush1.msra.mxu0 0.0
        %189 = vmatprep.subr.mxu0 0.0
        %190 = vmatpush1.msra.mxu0 0.0
        %191 = vmatprep.subr.mxu0 0.0
        %192 = vmatpush1.msra.mxu0 0.0
        %193 = vmatprep.subr.mxu0 0.0
        %194 = vmatpush1.msra.mxu0 0.0
        %195 = vmatprep.subr.mxu0 0.0
        %196 = vmatpush1.msra.mxu0 0.0
        %197 = vmatprep.subr.mxu0 0.0
        %198 = vmatpush1.msra.mxu0 0.0
        %199 = vmatprep.subr.mxu0 0.0
        %200 = vmatpush1.msra.mxu0 0.0
        %201 = vmatprep.subr.mxu0 0.0
        %202 = vmatpush1.msra.mxu0 0.0
        %203 = vmatprep.subr.mxu0 0.0
        %204 = vmatpush1.msra.mxu0 0.0
        %205 = vmatprep.subr.mxu0 0.0
        %206 = vmatpush1.msra.mxu0 0.0
        %207 = vmatprep.subr.mxu0 0.0
        %208 = vmatpush1.msra.mxu0 0.0
        %209 = vmatprep.subr.mxu0 0.0
        %210 = vmatpush1.msra.mxu0 0.0
        %211 = vmatprep.subr.mxu0 0.0
        %212 = vmatpush1.msra.mxu0 0.0
        %213 = vmatprep.subr.mxu0 0.0
        %214 = vmatpush1.msra.mxu0 0.0
        %215 = vmatprep.subr.mxu0 0.0
        %216 = vmatpush1.msra.mxu0 0.0
        %217 = vmatprep.subr.mxu0 0.0
        %218 = vmatpush1.msra.mxu0 0.0
        %219 = vmatprep.subr.mxu0 0.0
        %220 = vmatpush1.msra.mxu0 0.0
        %221 = vmatprep.subr.mxu0 0.0
        %222 = vmatpush1.msra.mxu0 0.0
        %223 = vmatprep.subr.mxu0 0.0
        %224 = vmatpush1.msra.mxu0 0.0
        %225 = vmatprep.subr.mxu0 0.0
        %226 = vmatpush1.msra.mxu0 0.0
        %227 = vmatprep.subr.mxu0 0.0
        %228 = vmatpush1.msra.mxu0 0.0
        %229 = vmatprep.mubr.f32.mxu0 0.0
        %230 = vmatmul.mubr.f32.gmra.mrb[0].mxu0 %v163
        %v231 = vpop.f32.mrb[0].mxu0
        %v232 = vadd.f32 0.0, %v231
        %v233 = vpop.f32.mrb[0].mxu0
        %234 = vdwg.mxu0
        %235 = vst.msk [vmem:[%s134] sm:$0xff] %vm140, %v232
        %s236 = sand.u32 %s71, 1
        %s237 = scalar_lea.sflag [#allocation3], %s236
        %s238 = sand.u32 %s71, 1
        %s239 = smul.addr %s238, 8
        %s240 = scalar_lea.vmem [#allocation2], %s239
        // Predicated region
        $region29: #{tpu_custom_call.1} parent=27 // pred_check
          %p241 = pneg %p81
        $region30: #{tpu_custom_call.1} parent=27 // pred_check_branch
          %243 = sbr.rel (%p241) target = $region32
        $region31: #{tpu_custom_call.1} parent=27 // pred_region
          %s245 = ssub.s32 128, 128
          %246 = vsyncadd %s237, %s245
          %s247 = smul.addr %s16, 128
          %s248 = scalar_lea.hbm %s2, %s247
          %s250 = sshll.u32 %s240, 4
          %s251 = int_to_ptr.vmem [resolvable:$true] %s250
          %253 = dma.vmem_to_hbm [thread:$0]  %s251, 128, %s248, %s237
        $region32: #{tpu_custom_call.1} parent=27 // pred_fallthru
          _
      $region28: #{tpu_custom_call.1} parent=5 // pred_fallthru
        _
      %p254 = scmp.le.s32.totalorder 2, %s11
      // Predicated region
      $region33: #{tpu_custom_call.1} parent=5 // pred_check
        %p255 = pneg %p254
      $region34: #{tpu_custom_call.1} parent=5 // pred_check_branch
        %257 = sbr.rel (%p255) target = $region36
      $region35: #{tpu_custom_call.1} parent=5 // pred_region
        %s258 = ssub.s32 %s11, 2
        // Predicated region
        $region37: #{tpu_custom_call.1} parent=35 // pred_check
          %p259 = pneg %p87
        $region38: #{tpu_custom_call.1} parent=35 // pred_check_branch
          %261 = sbr.rel (%p259) target = $region40
        $region39: #{tpu_custom_call.1} parent=35 // pred_region
          %s262 = sand.u32 %s72, 1
          %s263 = scalar_lea.sflag [#allocation3], %s262
          %s264 = sand.u32 %s72, 1
          %s265 = smul.addr %s264, 8
          %s266 = scalar_lea.vmem [#allocation2], %s265
          %267 = dma.done %s263, 128
        $region40: #{tpu_custom_call.1} parent=35 // pred_fallthru
          _
      $region36: #{tpu_custom_call.1} parent=5 // pred_fallthru
        _
    $region6: #{tpu_custom_call.1} parent=1 // loop_footer
      %s15 = sadd.s32 1, %s11
    $region7: #{tpu_custom_call.1} parent=1 // loop_footer_branch
      %10 = sbr.rel target = $region3
    $region8: #{tpu_custom_call.1} parent=1 // loop_exit
      _
    %268 = vsyncpa [#allocation3], 1
    %s269 = scalar_lea.sflag [#allocation3], 1
    %270 = vsyncpa %s269, 1

</llo_original>
